<compile_context>
chip_gen: v7x
topology: tpu7x:2x2x1
jax: 0.10.0
libtpu: 0.0.40
codegen_flags: <defaults>
</compile_context>

<pallas_src>
import jax
import jax.numpy as jnp
from jax.experimental import pallas as pl
from jax.experimental.pallas import tpu as pltpu

IN_DIM = 2        # nn.Linear(2, 20) input
HID = 20          # nn.Linear(2, 20) output
REP = 81          # four stack([x,x,x], dim=1) calls -> 3^4 identical copies
FLAT = REP * HID  # 1620 flattened features
OUT = 2           # linear3 output


def _affine_kernel(x_ref, w_ref, b_ref, o_ref):
    x = x_ref[...]            # (TB, IN_DIM)
    w = w_ref[...]            # (IN_DIM, OUT)  == w1 @ w3_folded
    b = b_ref[...]            # (1, OUT)       == b1 @ w3_folded + b3
    # K = N = 2: two broadcast FMAs per output column on the VPU — avoids the
    # MXU entirely (the systolic array would be >98% idle for a 2x2 weight).
    y = x[:, 0:1] * w[0:1, :] + x[:, 1:2] * w[1:2, :] + b
    # (B, 2) result -> lane-sparse masked store; write directly, no padding.
    o_ref[...] = y.astype(o_ref.dtype)


def model_forward(x, w1, b1, w3, b3, *, tb=1024):
    B = x.shape[0]

    # --- Weight folding (wrapper-side, weights are static) -----------------
    # Every one of the REP blocks of the flattened activation is the same h:
    #   flat @ w3 == h @ w3.reshape(REP, HID, OUT).sum(0)
    w3_folded = w3.reshape(REP, HID, OUT).sum(axis=0)        # (HID, OUT)
    # Fold both linears into a single affine map:
    #   y = (x @ w1 + b1) @ w3f + b3 = x @ (w1 @ w3f) + (b1 @ w3f + b3)
    w_eff = w1 @ w3_folded                                   # (IN_DIM, OUT)
    b_eff = b1 @ w3_folded + b3                              # (1, OUT)

    # --- Batch grid: blocks of tb rows (multiple of 8 sublanes) ------------
    tb = max(8, min(tb, ((B + 7) // 8) * 8))
    grid = (pl.cdiv(B, tb),)

    return pl.pallas_call(
        _affine_kernel,
        out_shape=jax.ShapeDtypeStruct((B, OUT), jnp.float32),
        grid_spec=pltpu.PrefetchScalarGridSpec(
            num_scalar_prefetch=0,
            grid=grid,
            in_specs=[
                pl.BlockSpec((tb, IN_DIM), lambda i: (i, 0)),   # x tile
                pl.BlockSpec((IN_DIM, OUT), lambda i: (0, 0)),  # folded weight
                pl.BlockSpec((1, OUT), lambda i: (0, 0)),       # folded bias
            ],
            out_specs=pl.BlockSpec((tb, OUT), lambda i: (i, 0)),
        ),
        compiler_params=pltpu.CompilerParams(
            dimension_semantics=("parallel",)),
    )(x, w_eff, b_eff)


def _reference(x, w1, b1, w3, b3):
    # Un-folded reference reproducing the original stack/stack/stack/stack ->
    # flatten -> linear data flow exactly.
    h = x @ w1 + b1
    h5 = jnp.broadcast_to(h[:, None, None, None, None, :],
                          (x.shape[0], 3, 3, 3, 3, HID))
    flat = h5.reshape(x.shape[0], -1)
    return flat @ w3 + b3


if __name__ == "__main__":
    key = jax.random.PRNGKey(0)
    kx, k1, kb1, k3, kb3 = jax.random.split(key, 5)

    # Deterministic, PyTorch-Linear-style uniform init (bound = 1/sqrt(fan_in)).
    x = jax.random.normal(kx, (2, IN_DIM), dtype=jnp.float32)

    bound1 = 1.0 / jnp.sqrt(jnp.float32(IN_DIM))
    w1 = jax.random.uniform(k1, (IN_DIM, HID), jnp.float32, -bound1, bound1)
    b1 = jax.random.uniform(kb1, (1, HID), jnp.float32, -bound1, bound1)

    bound3 = 1.0 / jnp.sqrt(jnp.float32(FLAT))
    w3 = jax.random.uniform(k3, (FLAT, OUT), jnp.float32, -bound3, bound3)
    b3 = jax.random.uniform(kb3, (1, OUT), jnp.float32, -bound3, bound3)

    out = jax.block_until_ready(model_forward(x, w1, b1, w3, b3))
    ref = _reference(x, w1, b1, w3, b3)

    assert out.shape == (2, OUT), out.shape
    assert jnp.allclose(out, ref, atol=1e-4, rtol=1e-4), (out, ref)

    print("KERNEL_OK")
</pallas_src>

<mosaic_0001>
module attributes {stable_mosaic.version = 11 : i64} {
  func.func @_affine_kernel(%arg0: i32, %arg1: memref<8x2xf32, #tpu.memory_space<vmem>>, %arg2: memref<2x2xf32, #tpu.memory_space<vmem>>, %arg3: memref<1x2xf32, #tpu.memory_space<vmem>>, %arg4: memref<8x2xf32, #tpu.memory_space<vmem>>) attributes {dimension_semantics = [#tpu.dimension_semantics<parallel>], iteration_bounds = array<i64: 1>, scalar_prefetch = 0 : i64, scratch_operands = 0 : i64, tpu.core_type = #tpu.core_type<tc>, window_params = [{transform_indices = @transform_0, window_bounds = array<i64: 8, 2>}, {pipeline_mode = #tpu.pipeline_mode<synchronous>, transform_indices = @transform_1, window_bounds = array<i64: 2, 2>}, {pipeline_mode = #tpu.pipeline_mode<synchronous>, transform_indices = @transform_2, window_bounds = array<i64: 1, 2>}, {transform_indices = @transform_3, window_bounds = array<i64: 8, 2>}]} {
    %c0 = arith.constant 0 : index
    %c0_0 = arith.constant 0 : index
    %0 = vector.load %arg1[%c0, %c0_0] : memref<8x2xf32, #tpu.memory_space<vmem>>, vector<8x2xf32>
    %c0_1 = arith.constant 0 : index
    %c0_2 = arith.constant 0 : index
    %1 = vector.load %arg2[%c0_1, %c0_2] : memref<2x2xf32, #tpu.memory_space<vmem>>, vector<2x2xf32>
    %c0_3 = arith.constant 0 : index
    %c0_4 = arith.constant 0 : index
    %2 = vector.load %arg3[%c0_3, %c0_4] : memref<1x2xf32, #tpu.memory_space<vmem>>, vector<1x2xf32>
    %3 = vector.extract_strided_slice %0 {offsets = [0, 0], sizes = [8, 1], strides = [1, 1]} : vector<8x2xf32> to vector<8x1xf32>
    %4 = vector.extract_strided_slice %1 {offsets = [0, 0], sizes = [1, 2], strides = [1, 1]} : vector<2x2xf32> to vector<1x2xf32>
    %5 = vector.broadcast %3 : vector<8x1xf32> to vector<8x2xf32>
    %6 = vector.broadcast %4 : vector<1x2xf32> to vector<8x2xf32>
    %7 = arith.mulf %5, %6 : vector<8x2xf32>
    %8 = vector.extract_strided_slice %0 {offsets = [0, 1], sizes = [8, 1], strides = [1, 1]} : vector<8x2xf32> to vector<8x1xf32>
    %9 = vector.extract_strided_slice %1 {offsets = [1, 0], sizes = [1, 2], strides = [1, 1]} : vector<2x2xf32> to vector<1x2xf32>
    %10 = vector.broadcast %8 : vector<8x1xf32> to vector<8x2xf32>
    %11 = vector.broadcast %9 : vector<1x2xf32> to vector<8x2xf32>
    %12 = arith.mulf %10, %11 : vector<8x2xf32>
    %13 = arith.addf %7, %12 : vector<8x2xf32>
    %14 = vector.broadcast %2 : vector<1x2xf32> to vector<8x2xf32>
    %15 = arith.addf %13, %14 : vector<8x2xf32>
    %c0_5 = arith.constant 0 : index
    %c0_6 = arith.constant 0 : index
    %16 = vector.load %arg4[%c0_5, %c0_6] : memref<8x2xf32, #tpu.memory_space<vmem>>, vector<8x2xf32>
    tpu.vector_store %arg4[%c0_5, %c0_6], %15 {strides = array<i32>} : memref<8x2xf32, #tpu.memory_space<vmem>>, vector<8x2xf32>,
    return
  }
  func.func @transform_0(%arg0: i32) -> (i32, i32) {
    %c0_i32 = arith.constant 0 : i32
    %c0_i32_0 = arith.constant 0 : i32
    return %arg0, %c0_i32 : i32, i32
  }
  func.func @transform_1(%arg0: i32) -> (i32, i32) {
    %c0_i32 = arith.constant 0 : i32
    %c0_i32_0 = arith.constant 0 : i32
    %c0_i32_1 = arith.constant 0 : i32
    return %c0_i32, %c0_i32_0 : i32, i32
  }
  func.func @transform_2(%arg0: i32) -> (i32, i32) {
    %c0_i32 = arith.constant 0 : i32
    %c0_i32_0 = arith.constant 0 : i32
    %c0_i32_1 = arith.constant 0 : i32
    return %c0_i32, %c0_i32_0 : i32, i32
  }
  func.func @transform_3(%arg0: i32) -> (i32, i32) {
    %c0_i32 = arith.constant 0 : i32
    %c0_i32_0 = arith.constant 0 : i32
    return %arg0, %c0_i32 : i32, i32
  }
}

</mosaic_0001>

<llo_original>
// kernel: tpu_custom_call.1
$region0: #{tpu_custom_call.1}
  #allocation0 [shape = 'u32[]', space=smem, size = 0x4, offset = 0x4, fixed_abs, tag = 'smem constant byte address 0x4 - core index']
  #allocation1 [shape = 'u32[144,128]{1,0:T(1,128)}', space=vmem, size = 0x12000, scoped, tag = 'internal scratch']
  %s0 = inlined_call_operand.hbm [shape: f32[2,2], index: 0, kind: input, shape index: {}]
  %s1 = inlined_call_operand.vmem [shape: f32[2,2], index: 1, kind: input, shape index: {}]
  %s2 = inlined_call_operand.vmem [shape: f32[1,2], index: 2, kind: input, shape index: {}]
  %s3 = inlined_call_operand.hbm [shape: f32[2,2], index: 3, kind: output, shape index: {}]
  %s4 = sld [smem:[#allocation0]]
  $region26: #{tpu_custom_call.1} parent=0
    _
  %s6 = ssub.s32 1, %s4
  %s7 = scalar_select 0, %s6, %s4
  $region1: #{tpu_custom_call.1} parent=0
    #allocation2 [shape = 'u8[4096]{0}', space=vmem, size = 0x1000, scoped, tag = 'input window, operand 0, single buffered']
    #allocation3 [shape = 's32[1]{0}', space=sflag, size = 0x4, scoped, tag = 'scoped memory for tpu_custom_call.1']
    #allocation4 [shape = 's32[1]{0}', space=sflag, size = 0x4, scoped, tag = 'scoped memory for tpu_custom_call.1']
    #allocation5 [shape = 'u8[4096]{0}', space=vmem, size = 0x1000, scoped, tag = 'output window, operand 0, single buffered']
    %8 = vsyncpa [#allocation3], 0
    %9 = vsyncpa [#allocation4], 0
    // Predicated region
    $region2: #{tpu_custom_call.1} parent=1 // pred_check
      _
    $region3: #{tpu_custom_call.1} parent=1 // pred_check_branch
      %11 = sbr.rel (0) target = $region5
    $region4: #{tpu_custom_call.1} parent=1 // pred_region
      %s13 = ssub.s32 128, 32
      %14 = vsyncadd [#allocation3], %s13
      %s15 = sshll.u32 [#allocation2], 4
      %s16 = int_to_ptr.vmem [resolvable:$true] %s15
      %21 = dma.hbm_to_vmem [thread:$0]  %s0, 32, %s16, [#allocation3], 32, 32, 2
    $region5: #{tpu_custom_call.1} parent=1 // pred_fallthru
      _
    // Predicated region
    $region6: #{tpu_custom_call.1} parent=1 // pred_check
      _
    $region7: #{tpu_custom_call.1} parent=1 // pred_check_branch
      %23 = sbr.rel (0) target = $region9
    $region8: #{tpu_custom_call.1} parent=1 // pred_region
      _
    $region9: #{tpu_custom_call.1} parent=1 // pred_fallthru
      _
    // Predicated region
    $region10: #{tpu_custom_call.1} parent=1 // pred_check
      _
    $region11: #{tpu_custom_call.1} parent=1 // pred_check_branch
      %25 = sbr.rel (0) target = $region13
    $region12: #{tpu_custom_call.1} parent=1 // pred_region
      _
    $region13: #{tpu_custom_call.1} parent=1 // pred_fallthru
      _
    // Predicated region
    $region14: #{tpu_custom_call.1} parent=1 // pred_check
      _
    $region15: #{tpu_custom_call.1} parent=1 // pred_check_branch
      %27 = sbr.rel (0) target = $region17
    $region16: #{tpu_custom_call.1} parent=1 // pred_region
      %28 = dma.done [#allocation3], 128
    $region17: #{tpu_custom_call.1} parent=1 // pred_fallthru
      _
    %v29 = vld [vmem:[#allocation2] sm:$0xff]
    %v30 = vld [vmem:[%s1] sm:$0x3]
    %v31 = vld [vmem:[%s2] sm:$0x1]
    %33 = vset.pattern.permute.xlu0 0
    %34 = vperm.xlu0 %33, %v29
    %v35 = vpop.permute.xlu0 %34
    %v37 = vlaneseq
    %v38 = vshrl.u32 %v37, 7
    %v39 = vsub.s32 0, %v38
    %v40 = vrot.slane %v30, %v39
    %v41 = vmul.f32 %v35, %v40
    %42 = vset.pattern.permute.xlu0 1
    %43 = vperm.xlu0 %42, %v29
    %v44 = vpop.permute.xlu0 %43
    %v46 = vlaneseq
    %v47 = vshrl.u32 %v46, 7
    %v48 = vsub.s32 1, %v47
    %v49 = vrot.slane %v30, %v48
    %v50 = vmul.f32 %v44, %v49
    %v51 = vadd.f32 %v41, %v50
    %v53 = vlaneseq
    %v54 = vshrl.u32 %v53, 7
    %v55 = vsub.s32 0, %v54
    %v56 = vrot.slane %v31, %v55
    %v58 = vadd.f32 %v51, %v56
    %vm59 = vcmask 15360
    %60 = vst.msk [vmem:[#allocation5] sm:$0xff] %vm59, %v58
    // Predicated region
    $region18: #{tpu_custom_call.1} parent=1 // pred_check
      _
    $region19: #{tpu_custom_call.1} parent=1 // pred_check_branch
      %62 = sbr.rel (0) target = $region21
    $region20: #{tpu_custom_call.1} parent=1 // pred_region
      %s64 = ssub.s32 128, 32
      %65 = vsyncadd [#allocation4], %s64
      %s66 = sshll.u32 [#allocation5], 4
      %s67 = int_to_ptr.vmem [resolvable:$true] %s66
      %72 = dma.vmem_to_hbm [thread:$0]  %s67, 32, %s3, [#allocation4], 32, 32, 2
    $region21: #{tpu_custom_call.1} parent=1 // pred_fallthru
      _
    // Predicated region
    $region22: #{tpu_custom_call.1} parent=1 // pred_check
      _
    $region23: #{tpu_custom_call.1} parent=1 // pred_check_branch
      %74 = sbr.rel (0) target = $region25
    $region24: #{tpu_custom_call.1} parent=1 // pred_region
      %75 = dma.done [#allocation4], 128
    $region25: #{tpu_custom_call.1} parent=1 // pred_fallthru
      _
    %76 = vsyncpa [#allocation3], 1
    %77 = vsyncpa [#allocation4], 1

</llo_original>
